<compile_context>
chip_gen: v5e
topology: v5e:2x2
jax: 0.10.0
libtpu: 0.0.40
codegen_flags: <defaults>
</compile_context>

<pallas_src>
import functools

import jax
import jax.numpy as jnp
from jax import lax
from jax.experimental import pallas as pl
from jax.experimental.pallas import tpu as pltpu

CIN = 2
COUT = 2
KH = KW = 3


def _conv3x3_kernel(x_ref, w_ref, b_ref, o_ref, xp_ref, *, H, W):
    # x_ref : (nb, CIN, H*W)  VMEM  -- unpadded inputs, spatial dims flattened
    # w_ref : (COUT*CIN*3*3,) SMEM  -- flat weights, PyTorch (co, ci, kh, kw)
    # b_ref : (COUT,)         SMEM  -- bias
    # o_ref : (nb, COUT, H*W) VMEM  -- lane-dense output (last dim = H*W)
    # xp_ref: (CIN, L)        VMEM  -- zero-padded flat working buffer
    nb = o_ref.shape[0]
    HW = H * W
    row_pitch = (H + 1) * W          # one zero row between consecutive images
    base = W + 1                     # zero row + 1 lane of slack at the front
    Q = nb * row_pitch - W           # span covering all nb images' output rows

    # ---- in-kernel zero padding: zero the scratch, then write the images in.
    xp_ref[...] = jnp.zeros(xp_ref.shape, xp_ref.dtype)
    for n in range(nb):
        off = base + n * row_pitch
        xp_ref[:, off:off + HW] = x_ref[n].astype(xp_ref.dtype)

    # ---- column-within-row masks for horizontal (kw) taps that would wrap
    #      across row boundaries in the flattened layout.
    col = lax.broadcasted_iota(jnp.int32, (1, Q), 1) % W
    ok_left = col != 0           # valid lanes for dw == -1
    ok_right = col != (W - 1)    # valid lanes for dw == +1

    # ---- build the 18 shifted (lane-rotated, XLU) taps ONCE; reused for both
    #      output channels below.
    taps = []
    for ci in range(CIN):
        row = xp_ref[ci:ci + 1, :]                       # (1, L), loaded once
        for dh in (-1, 0, 1):
            for dw in (-1, 0, 1):
                start = base + dh * W + dw
                t = row[:, start:start + Q]              # (1, Q) shifted view
                if dw == -1:
                    t = jnp.where(ok_left, t, 0.0)
                elif dw == 1:
                    t = jnp.where(ok_right, t, 0.0)
                taps.append((ci, dh, dw, t))

    # ---- 36 full-lane-width multiply-accumulates on the VPU.
    accs = []
    for co in range(COUT):
        acc = None
        for ci, dh, dw, t in taps:
            widx = ((co * CIN + ci) * KH + (dh + 1)) * KW + (dw + 1)
            term = t * w_ref[widx]
            acc = term if acc is None else acc + term
        accs.append(acc + b_ref[co])

    # ---- lane-dense stores: full H*W lanes per (n, co) plane.
    for n in range(nb):
        off = n * row_pitch
        out_n = jnp.concatenate(
            [accs[co][:, off:off + HW] for co in range(COUT)], axis=0)
        o_ref[n] = out_n.astype(o_ref.dtype)


def conv3x3_pallas(x, weight, bias):
    """x: (N, CIN, H, W) f32; weight: (COUT, CIN, 3, 3); bias: (COUT,)."""
    N, C, H, W = x.shape
    assert C == CIN
    HW = H * W

    # Batch tiling: grid extent 2 when possible so both v7x TensorCores get
    # work; each step handles nb = N // nsteps whole images in one block.
    nsteps = 2 if (N >= 2 and N % 2 == 0) else 1
    nb = N // nsteps

    # Flat working-buffer length: zero row + 1 lane in front, one zero row
    # between images, zero row + 1 lane at the back.
    L = nb * (H + 1) * W + W + 2

    x_flat = x.reshape(N, CIN, HW).astype(jnp.float32)   # free (contiguous)
    w_flat = weight.reshape(-1).astype(jnp.float32)
    b = bias.astype(jnp.float32)

    kernel = functools.partial(_conv3x3_kernel, H=H, W=W)

    out_flat = pl.pallas_call(
        kernel,
        grid=(nsteps,),
        in_specs=[
            pl.BlockSpec((nb, CIN, HW), lambda i: (i, 0, 0)),
            pl.BlockSpec(memory_space=pltpu.SMEM),
            pl.BlockSpec(memory_space=pltpu.SMEM),
        ],
        out_specs=pl.BlockSpec((nb, COUT, HW), lambda i: (i, 0, 0)),
        out_shape=jax.ShapeDtypeStruct((N, COUT, HW), jnp.float32),
        scratch_shapes=[pltpu.VMEM((CIN, L), jnp.float32)],
        compiler_params=pltpu.CompilerParams(
            dimension_semantics=("parallel",)),
    )(x_flat, w_flat, b)

    return out_flat.reshape(N, COUT, H, W)


def conv3x3_reference(x, weight, bias):
    y = lax.conv_general_dilated(
        x, weight,
        window_strides=(1, 1),
        padding=((1, 1), (1, 1)),
        dimension_numbers=("NCHW", "OIHW", "NCHW"))
    return y + bias[None, :, None, None]


if __name__ == "__main__":
    key = jax.random.PRNGKey(0)
    kx, kw, kb = jax.random.split(key, 3)

    N, H, W = 2, 16, 16
    x = jax.random.normal(kx, (N, CIN, H, W), dtype=jnp.float32)
    # Deterministic synthetic parameters (same shapes as nn.Conv2d(2, 2, 3, 1, 1)).
    weight = jax.random.normal(kw, (COUT, CIN, KH, KW), dtype=jnp.float32) * 0.1
    bias = jax.random.normal(kb, (COUT,), dtype=jnp.float32) * 0.1

    out = jax.block_until_ready(conv3x3_pallas(x, weight, bias))
    ref = jax.block_until_ready(conv3x3_reference(x, weight, bias))

    assert out.shape == (N, COUT, H, W)
    assert jnp.allclose(out, ref, atol=1e-5, rtol=1e-5)
    print("KERNEL_OK")
</pallas_src>

<mosaic_0001>
module attributes {stable_mosaic.version = 11 : i64} {
  func.func @_conv3x3_kernel(%arg0: i32, %arg1: memref<1x2x256xf32, #tpu.memory_space<vmem>>, %arg2: memref<36xf32, #tpu.memory_space<smem>>, %arg3: memref<2xf32, #tpu.memory_space<smem>>, %arg4: memref<1x2x256xf32, #tpu.memory_space<vmem>>, %arg5: memref<2x290xf32, #tpu.memory_space<vmem>>) attributes {dimension_semantics = [#tpu.dimension_semantics<parallel>], iteration_bounds = array<i64: 2>, scalar_prefetch = 0 : i64, scratch_operands = 1 : i64, tpu.core_type = #tpu.core_type<tc>, window_params = [{transform_indices = @transform_0, window_bounds = array<i64: 1, 2, 256>}, {transform_indices = @transform_1, window_bounds = array<i64: 36>}, {transform_indices = @transform_2, window_bounds = array<i64: 2>}, {transform_indices = @transform_3, window_bounds = array<i64: 1, 2, 256>}]} {
    %cst = arith.constant 0.000000e+00 : f32
    %0 = vector.broadcast %cst : f32 to vector<2x290xf32>
    %c0 = arith.constant 0 : index
    %c0_0 = arith.constant 0 : index
    %1 = vector.load %arg5[%c0, %c0_0] : memref<2x290xf32, #tpu.memory_space<vmem>>, vector<2x290xf32>
    tpu.vector_store %arg5[%c0, %c0_0], %0 {strides = array<i32>} : memref<2x290xf32, #tpu.memory_space<vmem>>, vector<2x290xf32>,
    %c0_1 = arith.constant 0 : index
    %c0_2 = arith.constant 0 : index
    %c0_3 = arith.constant 0 : index
    %2 = vector.load %arg1[%c0_1, %c0_2, %c0_3] : memref<1x2x256xf32, #tpu.memory_space<vmem>>, vector<1x2x256xf32>
    %3 = vector.shape_cast %2 : vector<1x2x256xf32> to vector<2x256xf32>
    %c0_4 = arith.constant 0 : index
    %c17 = arith.constant 17 : index
    %4 = vector.load %arg5[%c0_4, %c17] : memref<2x290xf32, #tpu.memory_space<vmem>>, vector<2x256xf32>
    tpu.vector_store %arg5[%c0_4, %c17], %3 {strides = array<i32>} : memref<2x290xf32, #tpu.memory_space<vmem>>, vector<2x256xf32>,
    %5 = tpu.iota {dimensions = array<i32: 1>} : vector<1x256xi32>
    %c16_i32 = arith.constant 16 : i32
    %c0_i32 = arith.constant 0 : i32
    %6 = arith.cmpi eq, %c16_i32, %c0_i32 : i32
    %c1_i32 = arith.constant 1 : i32
    %7 = arith.select %6, %c1_i32, %c16_i32 : i32
    %8 = vector.broadcast %7 : i32 to vector<1x256xi32>
    %9 = arith.remsi %5, %8 : vector<1x256xi32>
    %c0_i32_5 = arith.constant 0 : i32
    %10 = vector.broadcast %c0_i32_5 : i32 to vector<1x256xi32>
    %11 = arith.cmpi ne, %9, %10 : vector<1x256xi32>
    %c0_i32_6 = arith.constant 0 : i32
    %12 = vector.broadcast %c0_i32_6 : i32 to vector<1x256xi32>
    %13 = arith.cmpi slt, %9, %12 : vector<1x256xi32>
    %c0_i32_7 = arith.constant 0 : i32
    %14 = arith.cmpi slt, %7, %c0_i32_7 : i32
    %15 = vector.broadcast %14 : i1 to vector<1x256xi1>
    %16 = vector.broadcast %15 : vector<1x256xi1> to vector<1x256xi1>
    %17 = arith.xori %13, %16 : vector<1x256xi1>
    %18 = arith.andi %17, %11 : vector<1x256xi1>
    %19 = vector.broadcast %7 : i32 to vector<1x256xi32>
    %20 = arith.addi %9, %19 : vector<1x256xi32>
    %21 = arith.select %18, %20, %9 : vector<1x256xi1>, vector<1x256xi32>
    %c0_i32_8 = arith.constant 0 : i32
    %22 = vector.broadcast %c0_i32_8 : i32 to vector<1x256xi32>
    %23 = arith.cmpi ne, %21, %22 : vector<1x256xi32>
    %c15_i32 = arith.constant 15 : i32
    %24 = vector.broadcast %c15_i32 : i32 to vector<1x256xi32>
    %25 = arith.cmpi ne, %21, %24 : vector<1x256xi32>
    %c0_9 = arith.constant 0 : index
    %c0_10 = arith.constant 0 : index
    %26 = vector.load %arg5[%c0_9, %c0_10] : memref<2x290xf32, #tpu.memory_space<vmem>>, vector<1x290xf32>
    %27 = vector.extract_strided_slice %26 {offsets = [0, 0], sizes = [1, 256], strides = [1, 1]} : vector<1x290xf32> to vector<1x256xf32>
    %cst_11 = arith.constant 0.000000e+00 : f32
    %28 = vector.broadcast %cst_11 : f32 to vector<1x256xf32>
    %29 = arith.select %23, %27, %28 : vector<1x256xi1>, vector<1x256xf32>
    %30 = vector.extract_strided_slice %26 {offsets = [0, 1], sizes = [1, 256], strides = [1, 1]} : vector<1x290xf32> to vector<1x256xf32>
    %31 = vector.extract_strided_slice %26 {offsets = [0, 2], sizes = [1, 256], strides = [1, 1]} : vector<1x290xf32> to vector<1x256xf32>
    %cst_12 = arith.constant 0.000000e+00 : f32
    %32 = vector.broadcast %cst_12 : f32 to vector<1x256xf32>
    %33 = arith.select %25, %31, %32 : vector<1x256xi1>, vector<1x256xf32>
    %34 = vector.extract_strided_slice %26 {offsets = [0, 16], sizes = [1, 256], strides = [1, 1]} : vector<1x290xf32> to vector<1x256xf32>
    %cst_13 = arith.constant 0.000000e+00 : f32
    %35 = vector.broadcast %cst_13 : f32 to vector<1x256xf32>
    %36 = arith.select %23, %34, %35 : vector<1x256xi1>, vector<1x256xf32>
    %37 = vector.extract_strided_slice %26 {offsets = [0, 17], sizes = [1, 256], strides = [1, 1]} : vector<1x290xf32> to vector<1x256xf32>
    %38 = vector.extract_strided_slice %26 {offsets = [0, 18], sizes = [1, 256], strides = [1, 1]} : vector<1x290xf32> to vector<1x256xf32>
    %cst_14 = arith.constant 0.000000e+00 : f32
    %39 = vector.broadcast %cst_14 : f32 to vector<1x256xf32>
    %40 = arith.select %25, %38, %39 : vector<1x256xi1>, vector<1x256xf32>
    %41 = vector.extract_strided_slice %26 {offsets = [0, 32], sizes = [1, 256], strides = [1, 1]} : vector<1x290xf32> to vector<1x256xf32>
    %cst_15 = arith.constant 0.000000e+00 : f32
    %42 = vector.broadcast %cst_15 : f32 to vector<1x256xf32>
    %43 = arith.select %23, %41, %42 : vector<1x256xi1>, vector<1x256xf32>
    %44 = vector.extract_strided_slice %26 {offsets = [0, 33], sizes = [1, 256], strides = [1, 1]} : vector<1x290xf32> to vector<1x256xf32>
    %45 = vector.extract_strided_slice %26 {offsets = [0, 34], sizes = [1, 256], strides = [1, 1]} : vector<1x290xf32> to vector<1x256xf32>
    %cst_16 = arith.constant 0.000000e+00 : f32
    %46 = vector.broadcast %cst_16 : f32 to vector<1x256xf32>
    %47 = arith.select %25, %45, %46 : vector<1x256xi1>, vector<1x256xf32>
    %c1 = arith.constant 1 : index
    %c0_17 = arith.constant 0 : index
    %48 = vector.load %arg5[%c1, %c0_17] : memref<2x290xf32, #tpu.memory_space<vmem>>, vector<1x290xf32>
    %49 = vector.extract_strided_slice %48 {offsets = [0, 0], sizes = [1, 256], strides = [1, 1]} : vector<1x290xf32> to vector<1x256xf32>
    %cst_18 = arith.constant 0.000000e+00 : f32
    %50 = vector.broadcast %cst_18 : f32 to vector<1x256xf32>
    %51 = arith.select %23, %49, %50 : vector<1x256xi1>, vector<1x256xf32>
    %52 = vector.extract_strided_slice %48 {offsets = [0, 1], sizes = [1, 256], strides = [1, 1]} : vector<1x290xf32> to vector<1x256xf32>
    %53 = vector.extract_strided_slice %48 {offsets = [0, 2], sizes = [1, 256], strides = [1, 1]} : vector<1x290xf32> to vector<1x256xf32>
    %cst_19 = arith.constant 0.000000e+00 : f32
    %54 = vector.broadcast %cst_19 : f32 to vector<1x256xf32>
    %55 = arith.select %25, %53, %54 : vector<1x256xi1>, vector<1x256xf32>
    %56 = vector.extract_strided_slice %48 {offsets = [0, 16], sizes = [1, 256], strides = [1, 1]} : vector<1x290xf32> to vector<1x256xf32>
    %cst_20 = arith.constant 0.000000e+00 : f32
    %57 = vector.broadcast %cst_20 : f32 to vector<1x256xf32>
    %58 = arith.select %23, %56, %57 : vector<1x256xi1>, vector<1x256xf32>
    %59 = vector.extract_strided_slice %48 {offsets = [0, 17], sizes = [1, 256], strides = [1, 1]} : vector<1x290xf32> to vector<1x256xf32>
    %60 = vector.extract_strided_slice %48 {offsets = [0, 18], sizes = [1, 256], strides = [1, 1]} : vector<1x290xf32> to vector<1x256xf32>
    %cst_21 = arith.constant 0.000000e+00 : f32
    %61 = vector.broadcast %cst_21 : f32 to vector<1x256xf32>
    %62 = arith.select %25, %60, %61 : vector<1x256xi1>, vector<1x256xf32>
    %63 = vector.extract_strided_slice %48 {offsets = [0, 32], sizes = [1, 256], strides = [1, 1]} : vector<1x290xf32> to vector<1x256xf32>
    %cst_22 = arith.constant 0.000000e+00 : f32
    %64 = vector.broadcast %cst_22 : f32 to vector<1x256xf32>
    %65 = arith.select %23, %63, %64 : vector<1x256xi1>, vector<1x256xf32>
    %66 = vector.extract_strided_slice %48 {offsets = [0, 33], sizes = [1, 256], strides = [1, 1]} : vector<1x290xf32> to vector<1x256xf32>
    %67 = vector.extract_strided_slice %48 {offsets = [0, 34], sizes = [1, 256], strides = [1, 1]} : vector<1x290xf32> to vector<1x256xf32>
    %cst_23 = arith.constant 0.000000e+00 : f32
    %68 = vector.broadcast %cst_23 : f32 to vector<1x256xf32>
    %69 = arith.select %25, %67, %68 : vector<1x256xi1>, vector<1x256xf32>
    %c0_24 = arith.constant 0 : index
    %70 = memref.load %arg2[%c0_24] : memref<36xf32, #tpu.memory_space<smem>>
    %71 = vector.broadcast %70 : f32 to vector<1x256xf32>
    %72 = arith.mulf %29, %71 : vector<1x256xf32>
    %c1_25 = arith.constant 1 : index
    %73 = memref.load %arg2[%c1_25] : memref<36xf32, #tpu.memory_space<smem>>
    %74 = vector.broadcast %73 : f32 to vector<1x256xf32>
    %75 = arith.mulf %30, %74 : vector<1x256xf32>
    %76 = arith.addf %72, %75 : vector<1x256xf32>
    %c2 = arith.constant 2 : index
    %77 = memref.load %arg2[%c2] : memref<36xf32, #tpu.memory_space<smem>>
    %78 = vector.broadcast %77 : f32 to vector<1x256xf32>
    %79 = arith.mulf %33, %78 : vector<1x256xf32>
    %80 = arith.addf %76, %79 : vector<1x256xf32>
    %c3 = arith.constant 3 : index
    %81 = memref.load %arg2[%c3] : memref<36xf32, #tpu.memory_space<smem>>
    %82 = vector.broadcast %81 : f32 to vector<1x256xf32>
    %83 = arith.mulf %36, %82 : vector<1x256xf32>
    %84 = arith.addf %80, %83 : vector<1x256xf32>
    %c4 = arith.constant 4 : index
    %85 = memref.load %arg2[%c4] : memref<36xf32, #tpu.memory_space<smem>>
    %86 = vector.broadcast %85 : f32 to vector<1x256xf32>
    %87 = arith.mulf %37, %86 : vector<1x256xf32>
    %88 = arith.addf %84, %87 : vector<1x256xf32>
    %c5 = arith.constant 5 : index
    %89 = memref.load %arg2[%c5] : memref<36xf32, #tpu.memory_space<smem>>
    %90 = vector.broadcast %89 : f32 to vector<1x256xf32>
    %91 = arith.mulf %40, %90 : vector<1x256xf32>
    %92 = arith.addf %88, %91 : vector<1x256xf32>
    %c6 = arith.constant 6 : index
    %93 = memref.load %arg2[%c6] : memref<36xf32, #tpu.memory_space<smem>>
    %94 = vector.broadcast %93 : f32 to vector<1x256xf32>
    %95 = arith.mulf %43, %94 : vector<1x256xf32>
    %96 = arith.addf %92, %95 : vector<1x256xf32>
    %c7 = arith.constant 7 : index
    %97 = memref.load %arg2[%c7] : memref<36xf32, #tpu.memory_space<smem>>
    %98 = vector.broadcast %97 : f32 to vector<1x256xf32>
    %99 = arith.mulf %44, %98 : vector<1x256xf32>
    %100 = arith.addf %96, %99 : vector<1x256xf32>
    %c8 = arith.constant 8 : index
    %101 = memref.load %arg2[%c8] : memref<36xf32, #tpu.memory_space<smem>>
    %102 = vector.broadcast %101 : f32 to vector<1x256xf32>
    %103 = arith.mulf %47, %102 : vector<1x256xf32>
    %104 = arith.addf %100, %103 : vector<1x256xf32>
    %c9 = arith.constant 9 : index
    %105 = memref.load %arg2[%c9] : memref<36xf32, #tpu.memory_space<smem>>
    %106 = vector.broadcast %105 : f32 to vector<1x256xf32>
    %107 = arith.mulf %51, %106 : vector<1x256xf32>
    %108 = arith.addf %104, %107 : vector<1x256xf32>
    %c10 = arith.constant 10 : index
    %109 = memref.load %arg2[%c10] : memref<36xf32, #tpu.memory_space<smem>>
    %110 = vector.broadcast %109 : f32 to vector<1x256xf32>
    %111 = arith.mulf %52, %110 : vector<1x256xf32>
    %112 = arith.addf %108, %111 : vector<1x256xf32>
    %c11 = arith.constant 11 : index
    %113 = memref.load %arg2[%c11] : memref<36xf32, #tpu.memory_space<smem>>
    %114 = vector.broadcast %113 : f32 to vector<1x256xf32>
    %115 = arith.mulf %55, %114 : vector<1x256xf32>
    %116 = arith.addf %112, %115 : vector<1x256xf32>
    %c12 = arith.constant 12 : index
    %117 = memref.load %arg2[%c12] : memref<36xf32, #tpu.memory_space<smem>>
    %118 = vector.broadcast %117 : f32 to vector<1x256xf32>
    %119 = arith.mulf %58, %118 : vector<1x256xf32>
    %120 = arith.addf %116, %119 : vector<1x256xf32>
    %c13 = arith.constant 13 : index
    %121 = memref.load %arg2[%c13] : memref<36xf32, #tpu.memory_space<smem>>
    %122 = vector.broadcast %121 : f32 to vector<1x256xf32>
    %123 = arith.mulf %59, %122 : vector<1x256xf32>
    %124 = arith.addf %120, %123 : vector<1x256xf32>
    %c14 = arith.constant 14 : index
    %125 = memref.load %arg2[%c14] : memref<36xf32, #tpu.memory_space<smem>>
    %126 = vector.broadcast %125 : f32 to vector<1x256xf32>
    %127 = arith.mulf %62, %126 : vector<1x256xf32>
    %128 = arith.addf %124, %127 : vector<1x256xf32>
    %c15 = arith.constant 15 : index
    %129 = memref.load %arg2[%c15] : memref<36xf32, #tpu.memory_space<smem>>
    %130 = vector.broadcast %129 : f32 to vector<1x256xf32>
    %131 = arith.mulf %65, %130 : vector<1x256xf32>
    %132 = arith.addf %128, %131 : vector<1x256xf32>
    %c16 = arith.constant 16 : index
    %133 = memref.load %arg2[%c16] : memref<36xf32, #tpu.memory_space<smem>>
    %134 = vector.broadcast %133 : f32 to vector<1x256xf32>
    %135 = arith.mulf %66, %134 : vector<1x256xf32>
    %136 = arith.addf %132, %135 : vector<1x256xf32>
    %c17_26 = arith.constant 17 : index
    %137 = memref.load %arg2[%c17_26] : memref<36xf32, #tpu.memory_space<smem>>
    %138 = vector.broadcast %137 : f32 to vector<1x256xf32>
    %139 = arith.mulf %69, %138 : vector<1x256xf32>
    %140 = arith.addf %136, %139 : vector<1x256xf32>
    %c0_27 = arith.constant 0 : index
    %141 = memref.load %arg3[%c0_27] : memref<2xf32, #tpu.memory_space<smem>>
    %142 = vector.broadcast %141 : f32 to vector<1x256xf32>
    %143 = arith.addf %140, %142 : vector<1x256xf32>
    %c18 = arith.constant 18 : index
    %144 = memref.load %arg2[%c18] : memref<36xf32, #tpu.memory_space<smem>>
    %145 = vector.broadcast %144 : f32 to vector<1x256xf32>
    %146 = arith.mulf %29, %145 : vector<1x256xf32>
    %c19 = arith.constant 19 : index
    %147 = memref.load %arg2[%c19] : memref<36xf32, #tpu.memory_space<smem>>
    %148 = vector.broadcast %147 : f32 to vector<1x256xf32>
    %149 = arith.mulf %30, %148 : vector<1x256xf32>
    %150 = arith.addf %146, %149 : vector<1x256xf32>
    %c20 = arith.constant 20 : index
    %151 = memref.load %arg2[%c20] : memref<36xf32, #tpu.memory_space<smem>>
    %152 = vector.broadcast %151 : f32 to vector<1x256xf32>
    %153 = arith.mulf %33, %152 : vector<1x256xf32>
    %154 = arith.addf %150, %153 : vector<1x256xf32>
    %c21 = arith.constant 21 : index
    %155 = memref.load %arg2[%c21] : memref<36xf32, #tpu.memory_space<smem>>
    %156 = vector.broadcast %155 : f32 to vector<1x256xf32>
    %157 = arith.mulf %36, %156 : vector<1x256xf32>
    %158 = arith.addf %154, %157 : vector<1x256xf32>
    %c22 = arith.constant 22 : index
    %159 = memref.load %arg2[%c22] : memref<36xf32, #tpu.memory_space<smem>>
    %160 = vector.broadcast %159 : f32 to vector<1x256xf32>
    %161 = arith.mulf %37, %160 : vector<1x256xf32>
    %162 = arith.addf %158, %161 : vector<1x256xf32>
    %c23 = arith.constant 23 : index
    %163 = memref.load %arg2[%c23] : memref<36xf32, #tpu.memory_space<smem>>
    %164 = vector.broadcast %163 : f32 to vector<1x256xf32>
    %165 = arith.mulf %40, %164 : vector<1x256xf32>
    %166 = arith.addf %162, %165 : vector<1x256xf32>
    %c24 = arith.constant 24 : index
    %167 = memref.load %arg2[%c24] : memref<36xf32, #tpu.memory_space<smem>>
    %168 = vector.broadcast %167 : f32 to vector<1x256xf32>
    %169 = arith.mulf %43, %168 : vector<1x256xf32>
    %170 = arith.addf %166, %169 : vector<1x256xf32>
    %c25 = arith.constant 25 : index
    %171 = memref.load %arg2[%c25] : memref<36xf32, #tpu.memory_space<smem>>
    %172 = vector.broadcast %171 : f32 to vector<1x256xf32>
    %173 = arith.mulf %44, %172 : vector<1x256xf32>
    %174 = arith.addf %170, %173 : vector<1x256xf32>
    %c26 = arith.constant 26 : index
    %175 = memref.load %arg2[%c26] : memref<36xf32, #tpu.memory_space<smem>>
    %176 = vector.broadcast %175 : f32 to vector<1x256xf32>
    %177 = arith.mulf %47, %176 : vector<1x256xf32>
    %178 = arith.addf %174, %177 : vector<1x256xf32>
    %c27 = arith.constant 27 : index
    %179 = memref.load %arg2[%c27] : memref<36xf32, #tpu.memory_space<smem>>
    %180 = vector.broadcast %179 : f32 to vector<1x256xf32>
    %181 = arith.mulf %51, %180 : vector<1x256xf32>
    %182 = arith.addf %178, %181 : vector<1x256xf32>
    %c28 = arith.constant 28 : index
    %183 = memref.load %arg2[%c28] : memref<36xf32, #tpu.memory_space<smem>>
    %184 = vector.broadcast %183 : f32 to vector<1x256xf32>
    %185 = arith.mulf %52, %184 : vector<1x256xf32>
    %186 = arith.addf %182, %185 : vector<1x256xf32>
    %c29 = arith.constant 29 : index
    %187 = memref.load %arg2[%c29] : memref<36xf32, #tpu.memory_space<smem>>
    %188 = vector.broadcast %187 : f32 to vector<1x256xf32>
    %189 = arith.mulf %55, %188 : vector<1x256xf32>
    %190 = arith.addf %186, %189 : vector<1x256xf32>
    %c30 = arith.constant 30 : index
    %191 = memref.load %arg2[%c30] : memref<36xf32, #tpu.memory_space<smem>>
    %192 = vector.broadcast %191 : f32 to vector<1x256xf32>
    %193 = arith.mulf %58, %192 : vector<1x256xf32>
    %194 = arith.addf %190, %193 : vector<1x256xf32>
    %c31 = arith.constant 31 : index
    %195 = memref.load %arg2[%c31] : memref<36xf32, #tpu.memory_space<smem>>
    %196 = vector.broadcast %195 : f32 to vector<1x256xf32>
    %197 = arith.mulf %59, %196 : vector<1x256xf32>
    %198 = arith.addf %194, %197 : vector<1x256xf32>
    %c32 = arith.constant 32 : index
    %199 = memref.load %arg2[%c32] : memref<36xf32, #tpu.memory_space<smem>>
    %200 = vector.broadcast %199 : f32 to vector<1x256xf32>
    %201 = arith.mulf %62, %200 : vector<1x256xf32>
    %202 = arith.addf %198, %201 : vector<1x256xf32>
    %c33 = arith.constant 33 : index
    %203 = memref.load %arg2[%c33] : memref<36xf32, #tpu.memory_space<smem>>
    %204 = vector.broadcast %203 : f32 to vector<1x256xf32>
    %205 = arith.mulf %65, %204 : vector<1x256xf32>
    %206 = arith.addf %202, %205 : vector<1x256xf32>
    %c34 = arith.constant 34 : index
    %207 = memref.load %arg2[%c34] : memref<36xf32, #tpu.memory_space<smem>>
    %208 = vector.broadcast %207 : f32 to vector<1x256xf32>
    %209 = arith.mulf %66, %208 : vector<1x256xf32>
    %210 = arith.addf %206, %209 : vector<1x256xf32>
    %c35 = arith.constant 35 : index
    %211 = memref.load %arg2[%c35] : memref<36xf32, #tpu.memory_space<smem>>
    %212 = vector.broadcast %211 : f32 to vector<1x256xf32>
    %213 = arith.mulf %69, %212 : vector<1x256xf32>
    %214 = arith.addf %210, %213 : vector<1x256xf32>
    %c1_28 = arith.constant 1 : index
    %215 = memref.load %arg3[%c1_28] : memref<2xf32, #tpu.memory_space<smem>>
    %216 = vector.broadcast %215 : f32 to vector<1x256xf32>
    %217 = arith.addf %214, %216 : vector<1x256xf32>
    %218 = tpu.concatenate %143, %217 in 0 : vector<1x256xf32>, vector<1x256xf32> -> vector<2x256xf32>
    %c0_29 = arith.constant 0 : index
    %c0_30 = arith.constant 0 : index
    %c0_31 = arith.constant 0 : index
    %219 = vector.load %arg4[%c0_29, %c0_30, %c0_31] : memref<1x2x256xf32, #tpu.memory_space<vmem>>, vector<1x2x256xf32>
    %220 = vector.shape_cast %219 : vector<1x2x256xf32> to vector<2x256xf32>
    %221 = vector.shape_cast %218 : vector<2x256xf32> to vector<1x2x256xf32>
    tpu.vector_store %arg4[%c0_29, %c0_30, %c0_31], %221 {strides = array<i32>} : memref<1x2x256xf32, #tpu.memory_space<vmem>>, vector<1x2x256xf32>,
    return
  }
  func.func @transform_0(%arg0: i32) -> (i32, i32, i32) {
    %c0_i32 = arith.constant 0 : i32
    %c0_i32_0 = arith.constant 0 : i32
    %c0_i32_1 = arith.constant 0 : i32
    return %arg0, %c0_i32, %c0_i32_0 : i32, i32, i32
  }
  func.func @transform_1(%arg0: i32) -> i32 {
    %c0_i32 = arith.constant 0 : i32
    %c0_i32_0 = arith.constant 0 : i32
    return %c0_i32 : i32
  }
  func.func @transform_2(%arg0: i32) -> i32 {
    %c0_i32 = arith.constant 0 : i32
    %c0_i32_0 = arith.constant 0 : i32
    return %c0_i32 : i32
  }
  func.func @transform_3(%arg0: i32) -> (i32, i32, i32) {
    %c0_i32 = arith.constant 0 : i32
    %c0_i32_0 = arith.constant 0 : i32
    %c0_i32_1 = arith.constant 0 : i32
    return %arg0, %c0_i32, %c0_i32_0 : i32, i32, i32
  }
}

</mosaic_0001>

<llo_original>
// kernel: tpu_custom_call.1
$region0: #{tpu_custom_call.1}
  #allocation0 [shape = 'u32[]', space=smem, size = 0x4, offset = 0x4, fixed_abs, tag = 'smem constant byte address 0x4 - core index']
  #allocation1 [shape = 'u32[72,128]{1,0:T(1,128)}', space=vmem, size = 0x9000, scoped, tag = 'internal scratch']
  #allocation2 [shape = 'f32[2,290]{1,0:T(2,128)}', space=vmem, size = 0xc00, scoped, tag = 'scratch operand']
  %s0 = inlined_call_operand.hbm [shape: f32[2,2,256], index: 0, kind: input, shape index: {}]
  %s1 = inlined_call_operand.hbm [shape: f32[36], index: 1, kind: input, shape index: {}]
  %s2 = inlined_call_operand.vmem [shape: f32[2], index: 2, kind: input, shape index: {}]
  %s3 = inlined_call_operand.hbm [shape: f32[2,2,256], index: 3, kind: output, shape index: {}]
  %s4 = sld [smem:[#allocation0]]
  $region57: #{tpu_custom_call.1} parent=0
    _
  %s6 = ssub.s32 1, %s4
  %s7 = scalar_select 0, %s6, %s4
  $region1: #{tpu_custom_call.1} parent=0
    #allocation3 [shape = 'u8[4096]{0}', space=vmem, size = 0x1000, scoped, tag = 'input window, operand 0']
    #allocation4 [shape = 's32[2]{0}', space=sflag, size = 0x8, scoped, tag = 'scoped memory for tpu_custom_call.1']
    #allocation5 [shape = 's32[2]{0}', space=sflag, size = 0x8, scoped, tag = 'scoped memory for tpu_custom_call.1']
    #allocation6 [shape = 's32[2]{0}', space=sflag, size = 0x8, scoped, tag = 'scoped memory for tpu_custom_call.1']
    #allocation7 [shape = 's32[2]{0}', space=sflag, size = 0x8, scoped, tag = 'scoped memory for tpu_custom_call.1']
    #allocation8 [shape = 'u8[512]{0}', space=smem, size = 0x200, scoped, tag = 'input window, operand 1, single buffered']
    #allocation9 [shape = 'u8[512]{0}', space=smem, size = 0x200, scoped, tag = 'input window, operand 2, single buffered']
    #allocation10 [shape = 'u8[4096]{0}', space=vmem, size = 0x1000, scoped, tag = 'output window, operand 0']
    %8 = vsyncpa [#allocation4], 0
    %s9 = scalar_lea.sflag [#allocation4], 1
    %10 = vsyncpa %s9, 0
    %11 = vsyncpa [#allocation6], 0
    %12 = vsyncpa [#allocation7], 0
    %13 = vsyncpa [#allocation5], 0
    %s14 = scalar_lea.sflag [#allocation5], 1
    %15 = vsyncpa %s14, 0
    loop: start=0, step=1, limit=4
    $region2: #{tpu_custom_call.1} parent=1 // loop_pre_header
      _
    $region3: #{tpu_custom_call.1} parent=1 // loop_header
      %s17 = sphi 0, %s21
      %p18 = scmp.ge.s32.totalorder %s17, 4
      %s27 = sphi 0, %s29
      %s30 = sphi 0, %s27
      %s31 = sphi 0, %s30
      %s47 = sphi 0, %s31
      %s51 = sphi 0, %s51
      %s53 = sphi 0, %s51
      %s54 = sphi 0, %s53
      %s68 = sphi 0, %s54
      %s72 = sphi 0, %s72
      %s74 = sphi 0, %s72
      %s75 = sphi 0, %s74
      %s89 = sphi 0, %s75
      %s95 = sphi 0, %s97
      %s98 = sphi 0, %s95
      %s99 = sphi 0, %s98
      %s115 = sphi 0, %s99
    $region4: #{tpu_custom_call.1} parent=1 // loop_header_branch
      %20 = sbr.rel (%p18) target = $region8
    $region5: #{tpu_custom_call.1} parent=1 // loop_body
      %s22 = ssub.s32 %s17, 1
      %s23 = ssub.s32 %s17, 2
      %s24 = sadd.s32 %s17, 1
      %s25 = ssub.s32 %s17, %s24
      %p26 = scmp.eq.s32.totalorder %s25, 0
      %s28 = sadd.s32 %s27, 1
      %s29 = scalar_select %p26, %s27, %s28
      %p32 = pneg %p26
      %p33 = scmp.eq.s32.totalorder %s17, 1
      %p34 = por %p32, %p33
      %p35 = scmp.ne.s32.totalorder %s27, %s30
      %p36 = scmp.eq.s32.totalorder %s17, 0
      %p37 = por %p35, %p36
      %p38 = scmp.ne.s32.totalorder %s27, %s30
      %p39 = scmp.eq.s32.totalorder %s22, 1
      %p40 = por %p38, %p39
      %p41 = scmp.ne.s32.totalorder %s30, %s31
      %p42 = scmp.eq.s32.totalorder %s22, 0
      %p43 = por %p41, %p42
      %p44 = scmp.ne.s32.totalorder %s30, %s31
      %p45 = scmp.eq.s32.totalorder %s23, 1
      %p46 = por %p44, %p45
      %p48 = scmp.ne.s32.totalorder %s31, %s47
      %p49 = scmp.eq.s32.totalorder %s23, 0
      %p50 = por %p48, %p49
      %s52 = sadd.s32 %s51, 1
      %p55 = scmp.eq.s32.totalorder %s17, 1
      %p56 = scmp.ne.s32.totalorder %s51, %s53
      %p57 = scmp.eq.s32.totalorder %s17, 0
      %p58 = por %p56, %p57
      %p59 = scmp.ne.s32.totalorder %s51, %s53
      %p60 = scmp.eq.s32.totalorder %s22, 1
      %p61 = por %p59, %p60
      %p62 = scmp.ne.s32.totalorder %s53, %s54
      %p63 = scmp.eq.s32.totalorder %s22, 0
      %p64 = por %p62, %p63
      %p65 = scmp.ne.s32.totalorder %s53, %s54
      %p66 = scmp.eq.s32.totalorder %s23, 1
      %p67 = por %p65, %p66
      %p69 = scmp.ne.s32.totalorder %s54, %s68
      %p70 = scmp.eq.s32.totalorder %s23, 0
      %p71 = por %p69, %p70
      %s73 = sadd.s32 %s72, 1
      %p76 = scmp.eq.s32.totalorder %s17, 1
      %p77 = scmp.ne.s32.totalorder %s72, %s74
      %p78 = scmp.eq.s32.totalorder %s17, 0
      %p79 = por %p77, %p78
      %p80 = scmp.ne.s32.totalorder %s72, %s74
      %p81 = scmp.eq.s32.totalorder %s22, 1
      %p82 = por %p80, %p81
      %p83 = scmp.ne.s32.totalorder %s74, %s75
      %p84 = scmp.eq.s32.totalorder %s22, 0
      %p85 = por %p83, %p84
      %p86 = scmp.ne.s32.totalorder %s74, %s75
      %p87 = scmp.eq.s32.totalorder %s23, 1
      %p88 = por %p86, %p87
      %p90 = scmp.ne.s32.totalorder %s75, %s89
      %p91 = scmp.eq.s32.totalorder %s23, 0
      %p92 = por %p90, %p91
      %s93 = ssub.s32 %s17, %s24
      %p94 = scmp.eq.s32.totalorder %s93, 0
      %s96 = sadd.s32 %s95, 1
      %s97 = scalar_select %p94, %s95, %s96
      %p100 = pneg %p94
      %p101 = scmp.eq.s32.totalorder %s17, 1
      %p102 = por %p100, %p101
      %p103 = scmp.ne.s32.totalorder %s95, %s98
      %p104 = scmp.eq.s32.totalorder %s17, 0
      %p105 = por %p103, %p104
      %p106 = scmp.ne.s32.totalorder %s95, %s98
      %p107 = scmp.eq.s32.totalorder %s22, 1
      %p108 = por %p106, %p107
      %p109 = scmp.ne.s32.totalorder %s98, %s99
      %p110 = scmp.eq.s32.totalorder %s22, 0
      %p111 = por %p109, %p110
      %p112 = scmp.ne.s32.totalorder %s98, %s99
      %p113 = scmp.eq.s32.totalorder %s23, 1
      %p114 = por %p112, %p113
      %p116 = scmp.ne.s32.totalorder %s99, %s115
      %p117 = scmp.eq.s32.totalorder %s23, 0
      %p118 = por %p116, %p117
      %p119 = scmp.le.s32.totalorder 1, %s17
      %p120 = scmp.lt.s32.totalorder %s17, 3
      %p121 = pnand %p119, %p120
      %p122 = pneg %p121
      // Predicated region
      $region9: #{tpu_custom_call.1} parent=5 // pred_check
        _
      $region10: #{tpu_custom_call.1} parent=5 // pred_check_branch
        %124 = sbr.rel (%p121) target = $region12
      $region11: #{tpu_custom_call.1} parent=5 // pred_region
        %s125 = ssub.s32 %s17, 1
        // Predicated region
        $region13: #{tpu_custom_call.1} parent=11 // pred_check
          %p126 = pneg %p64
        $region14: #{tpu_custom_call.1} parent=11 // pred_check_branch
          %128 = sbr.rel (%p126) target = $region16
        $region15: #{tpu_custom_call.1} parent=11 // pred_region
          %130 = vsyncadd [#allocation6], 0
          %s132 = sshll.u32 %s1, 4
          %s133 = int_to_ptr.hbm [resolvable:$true] %s132
          %135 = dma.hbm_to_smem %s133, 16, [#allocation8], [#allocation6]
        $region16: #{tpu_custom_call.1} parent=11 // pred_fallthru
          _
        // Predicated region
        $region17: #{tpu_custom_call.1} parent=11 // pred_check
          %p136 = pneg %p85
        $region18: #{tpu_custom_call.1} parent=11 // pred_check_branch
          %138 = sbr.rel (%p136) target = $region20
        $region19: #{tpu_custom_call.1} parent=11 // pred_region
          %140 = vsyncadd [#allocation7], 0
          %s142 = sshll.u32 %s2, 4
          %s143 = int_to_ptr.vmem [resolvable:$true] %s142
          %145 = dma.vmem_to_smem %s143, 16, [#allocation9], [#allocation7]
        $region20: #{tpu_custom_call.1} parent=11 // pred_fallthru
          _
      $region12: #{tpu_custom_call.1} parent=5 // pred_fallthru
        _
      %p146 = scmp.lt.s32.totalorder %s17, 2
      // Predicated region
      $region21: #{tpu_custom_call.1} parent=5 // pred_check
        %p147 = pneg %p146
      $region22: #{tpu_custom_call.1} parent=5 // pred_check_branch
        %149 = sbr.rel (%p147) target = $region24
      $region23: #{tpu_custom_call.1} parent=5 // pred_region
        // Predicated region
        $region25: #{tpu_custom_call.1} parent=23 // pred_check
          %p150 = pneg %p37
        $region26: #{tpu_custom_call.1} parent=23 // pred_check_branch
          %152 = sbr.rel (%p150) target = $region28
        $region27: #{tpu_custom_call.1} parent=23 // pred_region
          %s153 = sand.u32 %s27, 1
          %s154 = scalar_lea.sflag [#allocation4], %s153
          %s155 = sand.u32 %s27, 1
          %s156 = smul.addr %s155, 4
          %s157 = scalar_lea.vmem [#allocation3], %s156
          %159 = vsyncadd %s154, 0
          %s160 = smul.addr %s17, 2
          %s161 = smul.addr %s160, 2
          %s162 = scalar_lea.hbm %s0, %s161
          %s164 = sshll.u32 %s162, 4
          %s165 = int_to_ptr.hbm [resolvable:$true] %s164
          %s166 = sshll.u32 %s157, 4
          %s167 = int_to_ptr.vmem [resolvable:$true] %s166
          %169 = dma.hbm_to_vmem [thread:$0]  %s165, 64, %s167, %s154
        $region28: #{tpu_custom_call.1} parent=23 // pred_fallthru
          _
      $region24: #{tpu_custom_call.1} parent=5 // pred_fallthru
        _
      %p170 = scmp.le.s32.totalorder 1, %s17
      %p171 = scmp.lt.s32.totalorder %s17, 3
      %p172 = pnand %p170, %p171
      %p173 = pneg %p172
      // Predicated region
      $region29: #{tpu_custom_call.1} parent=5 // pred_check
        _
      $region30: #{tpu_custom_call.1} parent=5 // pred_check_branch
        %175 = sbr.rel (%p172) target = $region32
      $region31: #{tpu_custom_call.1} parent=5 // pred_region
        %s176 = ssub.s32 %s17, 1
        %s177 = sand.u32 %s30, 1
        %s178 = scalar_lea.sflag [#allocation4], %s177
        %s179 = sand.u32 %s30, 1
        %s180 = smul.addr %s179, 4
        %s181 = scalar_lea.vmem [#allocation3], %s180
        // Predicated region
        $region33: #{tpu_custom_call.1} parent=31 // pred_check
          %p182 = pneg %p43
        $region34: #{tpu_custom_call.1} parent=31 // pred_check_branch
          %184 = sbr.rel (%p182) target = $region36
        $region35: #{tpu_custom_call.1} parent=31 // pred_region
          %186 = dma.done %s178, 64
        $region36: #{tpu_custom_call.1} parent=31 // pred_fallthru
          _
        // Predicated region
        $region37: #{tpu_custom_call.1} parent=31 // pred_check
          %p187 = pneg %p64
        $region38: #{tpu_custom_call.1} parent=31 // pred_check_branch
          %189 = sbr.rel (%p187) target = $region40
        $region39: #{tpu_custom_call.1} parent=31 // pred_region
          %191 = dma.done [#allocation6], 16
        $region40: #{tpu_custom_call.1} parent=31 // pred_fallthru
          _
        // Predicated region
        $region41: #{tpu_custom_call.1} parent=31 // pred_check
          %p192 = pneg %p85
        $region42: #{tpu_custom_call.1} parent=31 // pred_check_branch
          %194 = sbr.rel (%p192) target = $region44
        $region43: #{tpu_custom_call.1} parent=31 // pred_region
          %196 = dma.done [#allocation7], 16
        $region44: #{tpu_custom_call.1} parent=31 // pred_fallthru
          _
        %197 = sfence
        %s198 = sand.u32 %s30, 1
        %s199 = scalar_lea.sflag [#allocation4], %s198
        %s200 = sand.u32 %s30, 1
        %s201 = smul.addr %s200, 4
        %s202 = scalar_lea.vmem [#allocation3], %s201
        %p203 = pneg %p43
        %p204 = pneg %p40
        %p205 = pneg %p64
        %p206 = pneg %p61
        %p207 = pneg %p85
        %p208 = pneg %p82
        %p209 = pneg %p111
        %p210 = pneg %p108
        %s211 = sand.u32 %s98, 1
        %s212 = scalar_lea.sflag [#allocation5], %s211
        %s213 = sand.u32 %s98, 1
        %s214 = smul.addr %s213, 4
        %s215 = scalar_lea.vmem [#allocation10], %s214
        %vm216 = vcmask 1041408
        %vm217 = vcmask 1043458
        %vm218 = vmor %vm217, %vm216
        %vm219 = vcmask 275460
        %vm220 = vmor %vm219, %vm218
        %221 = vst.msk [vmem:[#allocation2] sm:$0x3f] %vm220, 0.0
        %v222 = vld [vmem:[%s181] sm:$0xf]
        %224 = vrot.lane.b32.xlu0 %v222, 17
        %v225 = vpop.permute.xlu0 %224
        %v226 = vrot.slane %v225, 6
        %vm227 = vcmask 138240
        %v228 = vsel %vm227, %v226, %v225
        %vm230 = vcmask 1041544
        %vm231 = vmor %vm217, %vm230
        %vm232 = vcmask 136196
        %vm233 = vmor %vm232, %vm231
        %234 = vst.msk [vmem:[#allocation2] sm:$0x3f] %vm233, %v228
        %v235 = vlaneseq
        %v236 = vand.u32 %v235, 127
        %v237 = vadd.s32 %v236, 128
        %vm238 = vcmp.lt.s32.totalorder %v236, 0
        %v239 = vsub.s32 0, %v236
        %v240 = vsel %vm238, %v239, %v236
        %v241 = vshrl.u32 %v240, 4
        %v242 = vand.u32 %v240, 15
        %v243 = vsub.s32 0, %v242
        %v244 = vsel %vm238, %v243, %v242
        %vm245 = vcmp.lt.s32.totalorder %v237, 0
        %v246 = vsub.s32 0, %v237
        %v247 = vsel %vm245, %v246, %v237
        %v248 = vshrl.u32 %v247, 4
        %v249 = vand.u32 %v247, 15
        %v250 = vsub.s32 0, %v249
        %v251 = vsel %vm245, %v250, %v249
        %vm252 = vcmp.ne.s32.totalorder %v244, 0
        %vm253 = vcmp.ne.s32.totalorder %v251, 0
        %vm254 = vcmp.lt.s32.totalorder %v244, 0
        %vm255 = vcmp.lt.s32.totalorder %v251, 0
        %vm256 = vmand %vm254, %vm252
        %vm257 = vmand %vm255, %vm253
        %v258 = vadd.s32 %v244, 16
        %v259 = vadd.s32 %v251, 16
        %v260 = vsel %vm256, %v258, %v244
        %v261 = vsel %vm257, %v259, %v251
        %vm262 = vcmp.ne.s32.totalorder %v260, 0
        %vm263 = vcmp.ne.s32.totalorder %v261, 0
        %vm264 = vcmp.ne.s32.totalorder %v260, 15
        %vm265 = vcmp.ne.s32.totalorder %v261, 15
        %v266 = vld [vmem:[#allocation2] ss:$2 sm:$0x7]
        %v268 = vperm.slane %v266, 0
        %v269 = vperm.slane %v266, 1
        %v272 = vsel %vm262, %v268, 0.0
        %v273 = vsel %vm263, %v269, 0.0
        %v274 = vperm.slane %v266, 2
        %275 = vrot.lane.b32.xlu0 %v268, 126
        %v276 = vpop.permute.xlu0 %275
        %277 = vrot.lane.b32.xlu0 %v269, 126
        %v278 = vpop.permute.xlu0 %277
        %279 = vrot.lane.b32.xlu0 %v274, 126
        %v280 = vpop.permute.xlu0 %279
        %vm281 = vcmask 1031168
        %v282 = vsel %vm281, %v276, %v278
        %v283 = vsel %vm281, %v278, %v280
        %v286 = vsel %vm264, %v282, 0.0
        %v287 = vsel %vm265, %v283, 0.0
        %288 = vrot.lane.b32.xlu0 %v268, 112
        %v289 = vpop.permute.xlu0 %288
        %290 = vrot.lane.b32.xlu0 %v269, 112
        %v291 = vpop.permute.xlu0 %290
        %292 = vrot.lane.b32.xlu0 %v274, 112
        %v293 = vpop.permute.xlu0 %292
        %vm294 = vcmask 916480
        %v295 = vsel %vm294, %v289, %v291
        %v296 = vsel %vm294, %v291, %v293
        %v299 = vsel %vm262, %v295, 0.0
        %v300 = vsel %vm263, %v296, 0.0
        %301 = vrot.lane.b32.xlu0 %v268, 110
        %v302 = vpop.permute.xlu0 %301
        %303 = vrot.lane.b32.xlu0 %v269, 110
        %v304 = vpop.permute.xlu0 %303
        %305 = vrot.lane.b32.xlu0 %v274, 110
        %v306 = vpop.permute.xlu0 %305
        %vm307 = vcmask 900096
        %v308 = vsel %vm307, %v302, %v304
        %v309 = vsel %vm307, %v304, %v306
        %v312 = vsel %vm264, %v308, 0.0
        %v313 = vsel %vm265, %v309, 0.0
        %314 = vrot.lane.b32.xlu0 %v268, 96
        %v315 = vpop.permute.xlu0 %314
        %316 = vrot.lane.b32.xlu0 %v269, 96
        %v317 = vpop.permute.xlu0 %316
        %318 = vrot.lane.b32.xlu0 %v274, 96
        %v319 = vpop.permute.xlu0 %318
        %vm320 = vcmask 785408
        %v321 = vsel %vm320, %v315, %v317
        %v322 = vsel %vm320, %v317, %v319
        %v325 = vsel %vm262, %v321, 0.0
        %v326 = vsel %vm263, %v322, 0.0
        %327 = vrot.lane.b32.xlu0 %v268, 94
        %v328 = vpop.permute.xlu0 %327
        %329 = vrot.lane.b32.xlu0 %v269, 94
        %v330 = vpop.permute.xlu0 %329
        %331 = vrot.lane.b32.xlu0 %v274, 94
        %v332 = vpop.permute.xlu0 %331
        %vm333 = vcmask 769024
        %v334 = vsel %vm333, %v328, %v330
        %v335 = vsel %vm333, %v330, %v332
        %v338 = vsel %vm264, %v334, 0.0
        %v339 = vsel %vm265, %v335, 0.0
        %s340 = scalar_lea.vmem [#allocation2], 1
        %v341 = vld [vmem:[%s340] ss:$2 sm:$0x7]
        %v343 = vperm.slane %v341, 0
        %v344 = vperm.slane %v341, 1
        %v347 = vsel %vm262, %v343, 0.0
        %v348 = vsel %vm263, %v344, 0.0
        %v349 = vperm.slane %v341, 2
        %350 = vrot.lane.b32.xlu0 %v343, 126
        %v351 = vpop.permute.xlu0 %350
        %352 = vrot.lane.b32.xlu0 %v344, 126
        %v353 = vpop.permute.xlu0 %352
        %354 = vrot.lane.b32.xlu0 %v349, 126
        %v355 = vpop.permute.xlu0 %354
        %v356 = vsel %vm281, %v351, %v353
        %v357 = vsel %vm281, %v353, %v355
        %v360 = vsel %vm264, %v356, 0.0
        %v361 = vsel %vm265, %v357, 0.0
        %362 = vrot.lane.b32.xlu0 %v343, 112
        %v363 = vpop.permute.xlu0 %362
        %364 = vrot.lane.b32.xlu0 %v344, 112
        %v365 = vpop.permute.xlu0 %364
        %366 = vrot.lane.b32.xlu0 %v349, 112
        %v367 = vpop.permute.xlu0 %366
        %v368 = vsel %vm294, %v363, %v365
        %v369 = vsel %vm294, %v365, %v367
        %v372 = vsel %vm262, %v368, 0.0
        %v373 = vsel %vm263, %v369, 0.0
        %374 = vrot.lane.b32.xlu0 %v343, 110
        %v375 = vpop.permute.xlu0 %374
        %376 = vrot.lane.b32.xlu0 %v344, 110
        %v377 = vpop.permute.xlu0 %376
        %378 = vrot.lane.b32.xlu0 %v349, 110
        %v379 = vpop.permute.xlu0 %378
        %v380 = vsel %vm307, %v375, %v377
        %v381 = vsel %vm307, %v377, %v379
        %v384 = vsel %vm264, %v380, 0.0
        %v385 = vsel %vm265, %v381, 0.0
        %386 = vrot.lane.b32.xlu0 %v343, 96
        %v387 = vpop.permute.xlu0 %386
        %388 = vrot.lane.b32.xlu0 %v344, 96
        %v389 = vpop.permute.xlu0 %388
        %390 = vrot.lane.b32.xlu0 %v349, 96
        %v391 = vpop.permute.xlu0 %390
        %v392 = vsel %vm320, %v387, %v389
        %v393 = vsel %vm320, %v389, %v391
        %v396 = vsel %vm262, %v392, 0.0
        %v397 = vsel %vm263, %v393, 0.0
        %398 = vrot.lane.b32.xlu0 %v343, 94
        %v399 = vpop.permute.xlu0 %398
        %400 = vrot.lane.b32.xlu0 %v344, 94
        %v401 = vpop.permute.xlu0 %400
        %402 = vrot.lane.b32.xlu0 %v349, 94
        %v403 = vpop.permute.xlu0 %402
        %v404 = vsel %vm333, %v399, %v401
        %v405 = vsel %vm333, %v401, %v403
        %v408 = vsel %vm264, %v404, 0.0
        %v409 = vsel %vm265, %v405, 0.0
        %s410 = sld [smem:[#allocation8]]
        %v411 = vstv %s410
        %v412 = vmul.f32 %v272, %v411
        %v413 = vmul.f32 %v273, %v411
        %s414 = sld [smem:[#allocation8 + $0x1]]
        %v415 = vstv %s414
        %v416 = vmul.f32 %v266, %v415
        %v418 = vperm.slane %v416, 0
        %v419 = vperm.slane %v416, 1
        %v420 = vperm.slane %v416, 2
        %421 = vrot.lane.b32.xlu0 %v418, 127
        %v422 = vpop.permute.xlu0 %421
        %423 = vrot.lane.b32.xlu0 %v419, 127
        %v424 = vpop.permute.xlu0 %423
        %425 = vrot.lane.b32.xlu0 %v420, 127
        %v426 = vpop.permute.xlu0 %425
        %vm427 = vcmask 1039360
        %v428 = vsel %vm427, %v422, %v424
        %v429 = vsel %vm427, %v424, %v426
        %v432 = vadd.f32 %v412, %v428
        %v433 = vadd.f32 %v413, %v429
        %s434 = sld [smem:[#allocation8 + $0x2]]
        %v435 = vstv %s434
        %v436 = vmul.f32 %v286, %v435
        %v437 = vmul.f32 %v287, %v435
        %v438 = vadd.f32 %v432, %v436
        %v439 = vadd.f32 %v433, %v437
        %s440 = sld [smem:[#allocation8 + $0x3]]
        %v441 = vstv %s440
        %v442 = vmul.f32 %v299, %v441
        %v443 = vmul.f32 %v300, %v441
        %v444 = vadd.f32 %v438, %v442
        %v445 = vadd.f32 %v439, %v443
        %s446 = sld [smem:[#allocation8 + $0x4]]
        %v447 = vstv %s446
        %v448 = vmul.f32 %v266, %v447
        %v450 = vperm.slane %v448, 0
        %v451 = vperm.slane %v448, 1
        %v452 = vperm.slane %v448, 2
        %453 = vrot.lane.b32.xlu0 %v450, 111
        %v454 = vpop.permute.xlu0 %453
        %455 = vrot.lane.b32.xlu0 %v451, 111
        %v456 = vpop.permute.xlu0 %455
        %457 = vrot.lane.b32.xlu0 %v452, 111
        %v458 = vpop.permute.xlu0 %457
        %vm459 = vcmask 908288
        %v460 = vsel %vm459, %v454, %v456
        %v461 = vsel %vm459, %v456, %v458
        %v464 = vadd.f32 %v444, %v460
        %v465 = vadd.f32 %v445, %v461
        %s466 = sld [smem:[#allocation8 + $0x5]]
        %v467 = vstv %s466
        %v468 = vmul.f32 %v312, %v467
        %v469 = vmul.f32 %v313, %v467
        %v470 = vadd.f32 %v464, %v468
        %v471 = vadd.f32 %v465, %v469
        %s472 = sld [smem:[#allocation8 + $0x6]]
        %v473 = vstv %s472
        %v474 = vmul.f32 %v325, %v473
        %v475 = vmul.f32 %v326, %v473
        %v476 = vadd.f32 %v470, %v474
        %v477 = vadd.f32 %v471, %v475
        %s478 = sld [smem:[#allocation8 + $0x7]]
        %v479 = vstv %s478
        %v480 = vmul.f32 %v266, %v479
        %v482 = vperm.slane %v480, 0
        %v483 = vperm.slane %v480, 1
        %v484 = vperm.slane %v480, 2
        %485 = vrot.lane.b32.xlu0 %v482, 95
        %v486 = vpop.permute.xlu0 %485
        %487 = vrot.lane.b32.xlu0 %v483, 95
        %v488 = vpop.permute.xlu0 %487
        %489 = vrot.lane.b32.xlu0 %v484, 95
        %v490 = vpop.permute.xlu0 %489
        %vm491 = vcmask 777216
        %v492 = vsel %vm491, %v486, %v488
        %v493 = vsel %vm491, %v488, %v490
        %v496 = vadd.f32 %v476, %v492
        %v497 = vadd.f32 %v477, %v493
        %s498 = sld [smem:[#allocation8 + $0x8]]
        %v499 = vstv %s498
        %v500 = vmul.f32 %v338, %v499
        %v501 = vmul.f32 %v339, %v499
        %v502 = vadd.f32 %v496, %v500
        %v503 = vadd.f32 %v497, %v501
        %s504 = sld [smem:[#allocation8 + $0x9]]
        %v505 = vstv %s504
        %v506 = vmul.f32 %v347, %v505
        %v507 = vmul.f32 %v348, %v505
        %v508 = vadd.f32 %v502, %v506
        %v509 = vadd.f32 %v503, %v507
        %s510 = sld [smem:[#allocation8 + $0xa]]
        %v511 = vstv %s510
        %v512 = vmul.f32 %v341, %v511
        %v514 = vperm.slane %v512, 0
        %v515 = vperm.slane %v512, 1
        %v516 = vperm.slane %v512, 2
        %517 = vrot.lane.b32.xlu0 %v514, 127
        %v518 = vpop.permute.xlu0 %517
        %519 = vrot.lane.b32.xlu0 %v515, 127
        %v520 = vpop.permute.xlu0 %519
        %521 = vrot.lane.b32.xlu0 %v516, 127
        %v522 = vpop.permute.xlu0 %521
        %v523 = vsel %vm427, %v518, %v520
        %v524 = vsel %vm427, %v520, %v522
        %v527 = vadd.f32 %v508, %v523
        %v528 = vadd.f32 %v509, %v524
        %s529 = sld [smem:[#allocation8 + $0xb]]
        %v530 = vstv %s529
        %v531 = vmul.f32 %v360, %v530
        %v532 = vmul.f32 %v361, %v530
        %v533 = vadd.f32 %v527, %v531
        %v534 = vadd.f32 %v528, %v532
        %s535 = sld [smem:[#allocation8 + $0xc]]
        %v536 = vstv %s535
        %v537 = vmul.f32 %v372, %v536
        %v538 = vmul.f32 %v373, %v536
        %v539 = vadd.f32 %v533, %v537
        %v540 = vadd.f32 %v534, %v538
        %s541 = sld [smem:[#allocation8 + $0xd]]
        %v542 = vstv %s541
        %v543 = vmul.f32 %v341, %v542
        %v545 = vperm.slane %v543, 0
        %v546 = vperm.slane %v543, 1
        %v547 = vperm.slane %v543, 2
        %548 = vrot.lane.b32.xlu0 %v545, 111
        %v549 = vpop.permute.xlu0 %548
        %550 = vrot.lane.b32.xlu0 %v546, 111
        %v551 = vpop.permute.xlu0 %550
        %552 = vrot.lane.b32.xlu0 %v547, 111
        %v553 = vpop.permute.xlu0 %552
        %v554 = vsel %vm459, %v549, %v551
        %v555 = vsel %vm459, %v551, %v553
        %v558 = vadd.f32 %v539, %v554
        %v559 = vadd.f32 %v540, %v555
        %s560 = sld [smem:[#allocation8 + $0xe]]
        %v561 = vstv %s560
        %v562 = vmul.f32 %v384, %v561
        %v563 = vmul.f32 %v385, %v561
        %v564 = vadd.f32 %v558, %v562
        %v565 = vadd.f32 %v559, %v563
        %s566 = sld [smem:[#allocation8 + $0xf]]
        %v567 = vstv %s566
        %v568 = vmul.f32 %v396, %v567
        %v569 = vmul.f32 %v397, %v567
        %v570 = vadd.f32 %v564, %v568
        %v571 = vadd.f32 %v565, %v569
        %s572 = sld [smem:[#allocation8 + $0x10]]
        %v573 = vstv %s572
        %v574 = vmul.f32 %v341, %v573
        %v576 = vperm.slane %v574, 0
        %v577 = vperm.slane %v574, 1
        %v578 = vperm.slane %v574, 2
        %579 = vrot.lane.b32.xlu0 %v576, 95
        %v580 = vpop.permute.xlu0 %579
        %581 = vrot.lane.b32.xlu0 %v577, 95
        %v582 = vpop.permute.xlu0 %581
        %583 = vrot.lane.b32.xlu0 %v578, 95
        %v584 = vpop.permute.xlu0 %583
        %v585 = vsel %vm491, %v580, %v582
        %v586 = vsel %vm491, %v582, %v584
        %v589 = vadd.f32 %v570, %v585
        %v590 = vadd.f32 %v571, %v586
        %s591 = sld [smem:[#allocation8 + $0x11]]
        %v592 = vstv %s591
        %v593 = vmul.f32 %v408, %v592
        %v594 = vmul.f32 %v409, %v592
        %v595 = vadd.f32 %v589, %v593
        %v596 = vadd.f32 %v590, %v594
        %s597 = sld [smem:[#allocation9]]
        %v598 = vstv %s597
        %v599 = vadd.f32 %v595, %v598
        %v600 = vadd.f32 %v596, %v598
        %s601 = sld [smem:[#allocation8 + $0x12]]
        %v602 = vstv %s601
        %v603 = vmul.f32 %v272, %v602
        %v604 = vmul.f32 %v273, %v602
        %s605 = sld [smem:[#allocation8 + $0x13]]
        %v606 = vstv %s605
        %v607 = vmul.f32 %v266, %v606
        %v609 = vperm.slane %v607, 0
        %v610 = vperm.slane %v607, 1
        %v611 = vperm.slane %v607, 2
        %612 = vrot.lane.b32.xlu0 %v609, 127
        %v613 = vpop.permute.xlu0 %612
        %614 = vrot.lane.b32.xlu0 %v610, 127
        %v615 = vpop.permute.xlu0 %614
        %616 = vrot.lane.b32.xlu0 %v611, 127
        %v617 = vpop.permute.xlu0 %616
        %v618 = vsel %vm427, %v613, %v615
        %v619 = vsel %vm427, %v615, %v617
        %v622 = vadd.f32 %v603, %v618
        %v623 = vadd.f32 %v604, %v619
        %s624 = sld [smem:[#allocation8 + $0x14]]
        %v625 = vstv %s624
        %v626 = vmul.f32 %v286, %v625
        %v627 = vmul.f32 %v287, %v625
        %v628 = vadd.f32 %v622, %v626
        %v629 = vadd.f32 %v623, %v627
        %s630 = sld [smem:[#allocation8 + $0x15]]
        %v631 = vstv %s630
        %v632 = vmul.f32 %v299, %v631
        %v633 = vmul.f32 %v300, %v631
        %v634 = vadd.f32 %v628, %v632
        %v635 = vadd.f32 %v629, %v633
        %s636 = sld [smem:[#allocation8 + $0x16]]
        %v637 = vstv %s636
        %v638 = vmul.f32 %v266, %v637
        %v640 = vperm.slane %v638, 0
        %v641 = vperm.slane %v638, 1
        %v642 = vperm.slane %v638, 2
        %643 = vrot.lane.b32.xlu0 %v640, 111
        %v644 = vpop.permute.xlu0 %643
        %645 = vrot.lane.b32.xlu0 %v641, 111
        %v646 = vpop.permute.xlu0 %645
        %647 = vrot.lane.b32.xlu0 %v642, 111
        %v648 = vpop.permute.xlu0 %647
        %v649 = vsel %vm459, %v644, %v646
        %v650 = vsel %vm459, %v646, %v648
        %v653 = vadd.f32 %v634, %v649
        %v654 = vadd.f32 %v635, %v650
        %s655 = sld [smem:[#allocation8 + $0x17]]
        %v656 = vstv %s655
        %v657 = vmul.f32 %v312, %v656
        %v658 = vmul.f32 %v313, %v656
        %v659 = vadd.f32 %v653, %v657
        %v660 = vadd.f32 %v654, %v658
        %s661 = sld [smem:[#allocation8 + $0x18]]
        %v662 = vstv %s661
        %v663 = vmul.f32 %v325, %v662
        %v664 = vmul.f32 %v326, %v662
        %v665 = vadd.f32 %v659, %v663
        %v666 = vadd.f32 %v660, %v664
        %s667 = sld [smem:[#allocation8 + $0x19]]
        %v668 = vstv %s667
        %v669 = vmul.f32 %v266, %v668
        %v671 = vperm.slane %v669, 0
        %v672 = vperm.slane %v669, 1
        %v673 = vperm.slane %v669, 2
        %674 = vrot.lane.b32.xlu0 %v671, 95
        %v675 = vpop.permute.xlu0 %674
        %676 = vrot.lane.b32.xlu0 %v672, 95
        %v677 = vpop.permute.xlu0 %676
        %678 = vrot.lane.b32.xlu0 %v673, 95
        %v679 = vpop.permute.xlu0 %678
        %v680 = vsel %vm491, %v675, %v677
        %v681 = vsel %vm491, %v677, %v679
        %v684 = vadd.f32 %v665, %v680
        %v685 = vadd.f32 %v666, %v681
        %s686 = sld [smem:[#allocation8 + $0x1a]]
        %v687 = vstv %s686
        %v688 = vmul.f32 %v338, %v687
        %v689 = vmul.f32 %v339, %v687
        %v690 = vadd.f32 %v684, %v688
        %v691 = vadd.f32 %v685, %v689
        %s692 = sld [smem:[#allocation8 + $0x1b]]
        %v693 = vstv %s692
        %v694 = vmul.f32 %v347, %v693
        %v695 = vmul.f32 %v348, %v693
        %v696 = vadd.f32 %v690, %v694
        %v697 = vadd.f32 %v691, %v695
        %s698 = sld [smem:[#allocation8 + $0x1c]]
        %v699 = vstv %s698
        %v700 = vmul.f32 %v341, %v699
        %v702 = vperm.slane %v700, 0
        %v703 = vperm.slane %v700, 1
        %v704 = vperm.slane %v700, 2
        %705 = vrot.lane.b32.xlu0 %v702, 127
        %v706 = vpop.permute.xlu0 %705
        %707 = vrot.lane.b32.xlu0 %v703, 127
        %v708 = vpop.permute.xlu0 %707
        %709 = vrot.lane.b32.xlu0 %v704, 127
        %v710 = vpop.permute.xlu0 %709
        %v711 = vsel %vm427, %v706, %v708
        %v712 = vsel %vm427, %v708, %v710
        %v715 = vadd.f32 %v696, %v711
        %v716 = vadd.f32 %v697, %v712
        %s717 = sld [smem:[#allocation8 + $0x1d]]
        %v718 = vstv %s717
        %v719 = vmul.f32 %v360, %v718
        %v720 = vmul.f32 %v361, %v718
        %v721 = vadd.f32 %v715, %v719
        %v722 = vadd.f32 %v716, %v720
        %s723 = sld [smem:[#allocation8 + $0x1e]]
        %v724 = vstv %s723
        %v725 = vmul.f32 %v372, %v724
        %v726 = vmul.f32 %v373, %v724
        %v727 = vadd.f32 %v721, %v725
        %v728 = vadd.f32 %v722, %v726
        %s729 = sld [smem:[#allocation8 + $0x1f]]
        %v730 = vstv %s729
        %v731 = vmul.f32 %v341, %v730
        %v733 = vperm.slane %v731, 0
        %v734 = vperm.slane %v731, 1
        %v735 = vperm.slane %v731, 2
        %736 = vrot.lane.b32.xlu0 %v733, 111
        %v737 = vpop.permute.xlu0 %736
        %738 = vrot.lane.b32.xlu0 %v734, 111
        %v739 = vpop.permute.xlu0 %738
        %740 = vrot.lane.b32.xlu0 %v735, 111
        %v741 = vpop.permute.xlu0 %740
        %v742 = vsel %vm459, %v737, %v739
        %v743 = vsel %vm459, %v739, %v741
        %v746 = vadd.f32 %v727, %v742
        %v747 = vadd.f32 %v728, %v743
        %s748 = sld [smem:[#allocation8 + $0x20]]
        %v749 = vstv %s748
        %v750 = vmul.f32 %v384, %v749
        %v751 = vmul.f32 %v385, %v749
        %v752 = vadd.f32 %v746, %v750
        %v753 = vadd.f32 %v747, %v751
        %s754 = sld [smem:[#allocation8 + $0x21]]
        %v755 = vstv %s754
        %v756 = vmul.f32 %v396, %v755
        %v757 = vmul.f32 %v397, %v755
        %v758 = vadd.f32 %v752, %v756
        %v759 = vadd.f32 %v753, %v757
        %s760 = sld [smem:[#allocation8 + $0x22]]
        %v761 = vstv %s760
        %v762 = vmul.f32 %v341, %v761
        %v764 = vperm.slane %v762, 0
        %v765 = vperm.slane %v762, 1
        %v766 = vperm.slane %v762, 2
        %767 = vrot.lane.b32.xlu0 %v764, 95
        %v768 = vpop.permute.xlu0 %767
        %769 = vrot.lane.b32.xlu0 %v765, 95
        %v770 = vpop.permute.xlu0 %769
        %771 = vrot.lane.b32.xlu0 %v766, 95
        %v772 = vpop.permute.xlu0 %771
        %v773 = vsel %vm491, %v768, %v770
        %v774 = vsel %vm491, %v770, %v772
        %v777 = vadd.f32 %v758, %v773
        %v778 = vadd.f32 %v759, %v774
        %s779 = sld [smem:[#allocation8 + $0x23]]
        %v780 = vstv %s779
        %v781 = vmul.f32 %v408, %v780
        %v782 = vmul.f32 %v409, %v780
        %v783 = vadd.f32 %v777, %v781
        %v784 = vadd.f32 %v778, %v782
        %s785 = sld [smem:[#allocation9 + $0x1]]
        %v786 = vstv %s785
        %v787 = vadd.f32 %v783, %v786
        %v788 = vadd.f32 %v784, %v786
        %v791 = vrot.slane %v787, 7
        %v792 = vrot.slane %v788, 7
        %vm795 = vcmask 1040384
        %v796 = vsel %vm795, %v599, %v791
        %v797 = vsel %vm795, %v600, %v792
        %v800 = vrot.slane %v797, 6
        %v801 = vsel %vm216, %v796, %v800
        %803 = vst [vmem:[%s215] sm:$0xf] %v801
        %s804 = sand.u32 %s98, 1
        %s805 = scalar_lea.sflag [#allocation5], %s804
        %s806 = sand.u32 %s98, 1
        %s807 = smul.addr %s806, 4
        %s808 = scalar_lea.vmem [#allocation10], %s807
        // Predicated region
        $region45: #{tpu_custom_call.1} parent=31 // pred_check
          %p809 = pneg %p108
        $region46: #{tpu_custom_call.1} parent=31 // pred_check_branch
          %811 = sbr.rel (%p809) target = $region48
        $region47: #{tpu_custom_call.1} parent=31 // pred_region
          %813 = vsyncadd %s805, 0
          %s814 = smul.addr %s22, 2
          %s815 = smul.addr %s814, 2
          %s816 = scalar_lea.hbm %s3, %s815
          %s818 = sshll.u32 %s808, 4
          %s819 = int_to_ptr.vmem [resolvable:$true] %s818
          %s820 = sshll.u32 %s816, 4
          %s821 = int_to_ptr.hbm [resolvable:$true] %s820
          %823 = dma.vmem_to_hbm [thread:$0]  %s819, 64, %s821, %s805
        $region48: #{tpu_custom_call.1} parent=31 // pred_fallthru
          _
      $region32: #{tpu_custom_call.1} parent=5 // pred_fallthru
        _
      %p824 = scmp.le.s32.totalorder 2, %s17
      // Predicated region
      $region49: #{tpu_custom_call.1} parent=5 // pred_check
        %p825 = pneg %p824
      $region50: #{tpu_custom_call.1} parent=5 // pred_check_branch
        %827 = sbr.rel (%p825) target = $region52
      $region51: #{tpu_custom_call.1} parent=5 // pred_region
        %s828 = ssub.s32 %s17, 2
        // Predicated region
        $region53: #{tpu_custom_call.1} parent=51 // pred_check
          %p829 = pneg %p114
        $region54: #{tpu_custom_call.1} parent=51 // pred_check_branch
          %831 = sbr.rel (%p829) target = $region56
        $region55: #{tpu_custom_call.1} parent=51 // pred_region
          %s832 = sand.u32 %s99, 1
          %s833 = scalar_lea.sflag [#allocation5], %s832
          %s834 = sand.u32 %s99, 1
          %s835 = smul.addr %s834, 4
          %s836 = scalar_lea.vmem [#allocation10], %s835
          %838 = dma.done %s833, 64
        $region56: #{tpu_custom_call.1} parent=51 // pred_fallthru
          _
      $region52: #{tpu_custom_call.1} parent=5 // pred_fallthru
        _
    $region6: #{tpu_custom_call.1} parent=1 // loop_footer
      %s21 = sadd.s32 1, %s17
    $region7: #{tpu_custom_call.1} parent=1 // loop_footer_branch
      %16 = sbr.rel target = $region3
    $region8: #{tpu_custom_call.1} parent=1 // loop_exit
      _
    %839 = vsyncpa [#allocation4], 1
    %s840 = scalar_lea.sflag [#allocation4], 1
    %841 = vsyncpa %s840, 1
    %842 = vsyncpa [#allocation5], 1
    %s843 = scalar_lea.sflag [#allocation5], 1
    %844 = vsyncpa %s843, 1
    %845 = vsyncpa [#allocation6], 1
    %s846 = scalar_lea.sflag [#allocation6], 1
    %847 = vsyncpa %s846, 1
    %848 = vsyncpa [#allocation7], 1
    %s849 = scalar_lea.sflag [#allocation7], 1
    %850 = vsyncpa %s849, 1

</llo_original>
